<compile_context>
chip_gen: v7x
topology: tpu7x:2x2x1
jax: 0.10.0
libtpu: 0.0.40
codegen_flags: <defaults>
</compile_context>

<pallas_src>
import jax
import jax.numpy as jnp
from jax.experimental import pallas as pl
from jax.experimental.pallas import tpu as pltpu

LANE = 128
SUB_BF16 = 16  # bf16 sublane packing granularity


def _round_up(a, b):
    return (a + b - 1) // b * b


def _cdiv(a, b):
    return (a + b - 1) // b


def _vmem_capacity_bytes():
    """Per-core VMEM capacity (v5e/v6e: 128 MiB, v7x: 64 MiB)."""
    try:
        cap = int(pltpu.get_tpu_info().vmem_capacity_bytes)
        if cap > 0:
            return cap
    except Exception:
        pass
    return 64 * 1024 * 1024  # conservative fallback (v7x per-TC VMEM)


# ---------------------------------------------------------------------------
# Pallas kernel: fused (transposed patch-matmul) + BN shift + SiLU
# ---------------------------------------------------------------------------

def fused_convT_bn_silu_kernel(w_ref, x_ref, shift_ref, o_ref):
    """o^T = silu(W_f^T @ X^T + shift) for one lane-tile of patch columns.

    Operands are bf16 (MXU), accumulation and the BN+SiLU epilogue are f32
    (v5e VPU/EUP have no bf16); the store is bf16 (halves vst + writeback).
    """
    acc = jnp.dot(w_ref[...], x_ref[...], preferred_element_type=jnp.float32)
    y = acc + shift_ref[...]           # (Np, tm) + (Np, 1) broadcast over lanes
    y = y * jax.nn.sigmoid(y)          # SiLU; sigmoid runs on the EUP slot
    o_ref[...] = y.astype(o_ref.dtype)


# ---------------------------------------------------------------------------
# Tile selection (generation-aware VMEM budget)
# ---------------------------------------------------------------------------

def _pick_col_tile(M, K, Np, budget):
    """Largest multiple-of-128 lane tile that fits the VMEM budget."""
    resident = Np * K * 2 + Np * 4      # W^T (bf16) + shift (f32): loaded once
    tm = 16 * LANE                      # start at 2048 lanes
    while tm > LANE:
        x_bytes = 3 * K * tm * 2        # bf16 X^T tile, up to triple-buffered
        o_bytes = 2 * Np * tm * 2       # bf16 out tile, double-buffered
        if resident + x_bytes + o_bytes <= budget:
            break
        tm //= 2
    tm = max(LANE, min(tm, _round_up(M, LANE)))
    # Guarantee >=4 grid steps when M allows: shards across v7x's 2 TCs and
    # gives the BlockSpec pipeline something to overlap (~0.35 us/step cost).
    if M >= 4 * LANE:
        tm = min(tm, _round_up(_cdiv(M, 4), LANE))
    return tm


# ---------------------------------------------------------------------------
# Wrapper around pallas_call
# ---------------------------------------------------------------------------

def fused_matmul_bn_silu_T(Xt, Wt, shift):
    """Xt: (K, M) bf16 patch matrix (transposed), Wt: (N, K) bf16 BN-folded
    weights, shift: (N,) f32.  Returns silu(Wt @ Xt + shift) as (N, M) bf16."""
    K, M = Xt.shape
    N = Wt.shape[0]

    # c2 pads only to bf16 sublane granularity (16), never to 128 lanes.
    Np = _round_up(N, SUB_BF16)
    if Np != N:
        Wt = jnp.pad(Wt, ((0, Np - N), (0, 0)))
        shift = jnp.pad(shift, (0, Np - N))
    shift2 = shift.astype(jnp.float32).reshape(Np, 1)

    cap = _vmem_capacity_bytes()
    budget = int(cap * 0.6)             # ~77 MiB on v5e/v6e, ~38 MiB on v7x
    tm = _pick_col_tile(M, K, Np, budget)

    M_pad = _round_up(M, tm)
    if M_pad != M:
        Xt = jnp.pad(Xt, ((0, 0), (0, M_pad - M)))   # bf16 pad (half-width copy)
    m_tiles = M_pad // tm

    if m_tiles >= 3:
        # Third buffer on the streaming input hides HBM latency jitter.
        x_spec = pl.BlockSpec((K, tm), lambda i: (0, i),
                              pipeline_mode=pl.Buffered(3))
    else:
        x_spec = pl.BlockSpec((K, tm), lambda i: (0, i))

    out = pl.pallas_call(
        fused_convT_bn_silu_kernel,
        out_shape=jax.ShapeDtypeStruct((Np, M_pad), jnp.bfloat16),
        grid=(m_tiles,),
        in_specs=[
            pl.BlockSpec((Np, K), lambda i: (0, 0)),   # W^T: resident
            x_spec,                                    # X^T: streamed
            pl.BlockSpec((Np, 1), lambda i: (0, 0)),   # shift: resident
        ],
        out_specs=pl.BlockSpec((Np, tm), lambda i: (0, i)),
        compiler_params=pltpu.CompilerParams(
            dimension_semantics=("parallel",),
            vmem_limit_bytes=min(int(cap * 0.75), 100 * 1024 * 1024),
        ),
        cost_estimate=pl.CostEstimate(
            flops=2 * M * K * N,
            transcendentals=M * N,
            bytes_accessed=(2 * K * M_pad + 2 * Np * K + 4 * Np
                            + 2 * Np * M_pad),
        ),
    )(Wt, Xt, shift2)
    return out[:N, :M]


# ---------------------------------------------------------------------------
# Module forward
# ---------------------------------------------------------------------------

def downsample_forward(x, params, scale_factor=2, bn_eps=1e-3):
    """Downsample(c1, c2, s): strided conv (k=s, stride=s, pad=0, no bias)
    + eval-mode BatchNorm + SiLU.  x: (B, C, H, W) NCHW f32 -> NCHW f32."""
    B, C, H, W = x.shape
    s = scale_factor
    Ho, Wo = H // s, W // s
    K = C * s * s

    w = params["conv_w"]                                  # (C_out, C, s, s) OIHW
    C_out = w.shape[0]

    bn = params["bn"]
    scale = bn["gamma"] / jnp.sqrt(bn["var"] + bn_eps)
    shift = bn["beta"] - bn["mean"] * scale

    # Fold BN scale into the weights in f32, then cast to bf16 for the MXU.
    Wt = (w.reshape(C_out, K).astype(jnp.float32)
          * scale.astype(jnp.float32)[:, None]).astype(jnp.bfloat16)   # (N, K)

    # Space-to-depth in transposed (K, M) layout.  Cast to bf16 FIRST so the
    # single unavoidable rearrangement copy is half-width.  Column order
    # (c, kh, kw) matches PyTorch OIHW weight flattening.
    xb = x[:, :, :Ho * s, :Wo * s].astype(jnp.bfloat16)
    xt = xb.reshape(B, C, Ho, s, Wo, s).transpose(1, 3, 5, 0, 2, 4)     # (C,s,s,B,Ho,Wo)
    Xt = xt.reshape(K, B * Ho * Wo)                                     # (K, M)

    yt = fused_matmul_bn_silu_T(Xt, Wt, shift)            # (C_out, M) bf16
    # One output rearrangement at the module boundary; the bf16->f32 cast
    # fuses with it (read bf16, write f32 NCHW).
    y = yt.reshape(C_out, B, Ho, Wo).transpose(1, 0, 2, 3).astype(jnp.float32)
    return y


def downsample_reference(x, params, scale_factor=2, bn_eps=1e-3):
    """Pure-JAX f32 reference (correctness check only)."""
    s = scale_factor
    y = jax.lax.conv_general_dilated(
        x, params["conv_w"], window_strides=(s, s), padding="VALID",
        dimension_numbers=("NCHW", "OIHW", "NCHW"))
    bn = params["bn"]
    scale = (bn["gamma"] / jnp.sqrt(bn["var"] + bn_eps)).reshape(1, -1, 1, 1)
    shift = (bn["beta"] - bn["mean"] * bn["gamma"] /
             jnp.sqrt(bn["var"] + bn_eps)).reshape(1, -1, 1, 1)
    y = y * scale + shift
    return y * jax.nn.sigmoid(y)


# ---------------------------------------------------------------------------
# Deterministic parameter initialization (synthetic, not a checkpoint)
# ---------------------------------------------------------------------------

def init_downsample(key, c1, c2, s):
    k1, k2, k3, k4, k5 = jax.random.split(key, 5)
    return dict(
        conv_w=0.1 * jax.random.normal(k1, (c2, c1, s, s), jnp.float32),
        bn=dict(
            gamma=1.0 + 0.1 * jax.random.normal(k2, (c2,), jnp.float32),
            beta=0.05 * jax.random.normal(k3, (c2,), jnp.float32),
            mean=0.05 * jax.random.normal(k4, (c2,), jnp.float32),
            var=1.0 + 0.1 * jnp.abs(jax.random.normal(k5, (c2,), jnp.float32)),
        ),
    )


# ---------------------------------------------------------------------------

if __name__ == "__main__":
    key = jax.random.PRNGKey(0)
    kx, kp = jax.random.split(key, 2)

    # Downsample(in_channels=4, out_channels=8, scale_factor=2)
    B, c1, c2, H, W = 2, 4, 8, 16, 16
    s = 2

    x = jax.random.normal(kx, (B, c1, H, W), jnp.float32)
    params = init_downsample(kp, c1, c2, s)

    y = downsample_forward(x, params, scale_factor=s)
    jax.block_until_ready(y)
    assert y.shape == (B, c2, H // s, W // s), y.shape

    # Loose tolerance: MXU operands and the stored output are bf16
    # (accumulation and the BN/SiLU epilogue are f32).
    y_ref = downsample_reference(x, params, scale_factor=s)
    max_err = float(jnp.max(jnp.abs(y - y_ref)))
    assert max_err < 5e-2, max_err

    print("KERNEL_OK")
</pallas_src>

<mosaic_0001>
module attributes {stable_mosaic.version = 11 : i64} {
  func.func @fused_convT_bn_silu_kernel(%arg0: i32, %arg1: memref<16x16xbf16, #tpu.memory_space<vmem>>, %arg2: memref<16x128xbf16, #tpu.memory_space<vmem>>, %arg3: memref<16x1xf32, #tpu.memory_space<vmem>>, %arg4: memref<16x128xbf16, #tpu.memory_space<vmem>>) attributes {dimension_semantics = [#tpu.dimension_semantics<parallel>], iteration_bounds = array<i64: 1>, scalar_prefetch = 0 : i64, scratch_operands = 0 : i64, tpu.core_type = #tpu.core_type<tc>, window_params = [{pipeline_mode = #tpu.pipeline_mode<synchronous>, transform_indices = @transform_0, window_bounds = array<i64: 16, 16>}, {transform_indices = @transform_1, window_bounds = array<i64: 16, 128>}, {pipeline_mode = #tpu.pipeline_mode<synchronous>, transform_indices = @transform_2, window_bounds = array<i64: 16, 1>}, {transform_indices = @transform_3, window_bounds = array<i64: 16, 128>}]} {
    %c0 = arith.constant 0 : index
    %c0_0 = arith.constant 0 : index
    %0 = vector.load %arg1[%c0, %c0_0] : memref<16x16xbf16, #tpu.memory_space<vmem>>, vector<16x16xbf16>
    %c0_1 = arith.constant 0 : index
    %c0_2 = arith.constant 0 : index
    %1 = vector.load %arg2[%c0_1, %c0_2] : memref<16x128xbf16, #tpu.memory_space<vmem>>, vector<16x128xbf16>
    %cst = arith.constant dense<0.000000e+00> : vector<16x128xf32>
    %2 = tpu.matmul %0, %1, %cst {dimension_numbers = #tpu.dot_dimension_numbers<[1], [0], [0], [1], [0, 0, 1, 1], [], []>} : vector<16x16xbf16>, vector<16x128xbf16>, vector<16x128xf32> -> vector<16x128xf32>
    %c0_3 = arith.constant 0 : index
    %c0_4 = arith.constant 0 : index
    %3 = vector.load %arg3[%c0_3, %c0_4] : memref<16x1xf32, #tpu.memory_space<vmem>>, vector<16x1xf32>
    %4 = vector.broadcast %3 : vector<16x1xf32> to vector<16x128xf32>
    %5 = arith.addf %2, %4 : vector<16x128xf32>
    %6 = arith.negf %5 : vector<16x128xf32>
    %7 = math.exp %6 : vector<16x128xf32>
    %cst_5 = arith.constant 1.000000e+00 : f32
    %8 = vector.broadcast %cst_5 : f32 to vector<16x128xf32>
    %9 = arith.addf %8, %7 : vector<16x128xf32>
    %10 = arith.divf %8, %9 : vector<16x128xf32>
    %11 = arith.mulf %5, %10 : vector<16x128xf32>
    %12 = arith.truncf %11 : vector<16x128xf32> to vector<16x128xbf16>
    %c0_6 = arith.constant 0 : index
    %c0_7 = arith.constant 0 : index
    %13 = vector.load %arg4[%c0_6, %c0_7] : memref<16x128xbf16, #tpu.memory_space<vmem>>, vector<16x128xbf16>
    tpu.vector_store %arg4[%c0_6, %c0_7], %12 {strides = array<i32>} : memref<16x128xbf16, #tpu.memory_space<vmem>>, vector<16x128xbf16>,
    return
  }
  func.func @transform_0(%arg0: i32) -> (i32, i32) {
    %c0_i32 = arith.constant 0 : i32
    %c0_i32_0 = arith.constant 0 : i32
    %c0_i32_1 = arith.constant 0 : i32
    return %c0_i32, %c0_i32_0 : i32, i32
  }
  func.func @transform_1(%arg0: i32) -> (i32, i32) {
    %c0_i32 = arith.constant 0 : i32
    %c0_i32_0 = arith.constant 0 : i32
    return %c0_i32, %arg0 : i32, i32
  }
  func.func @transform_2(%arg0: i32) -> (i32, i32) {
    %c0_i32 = arith.constant 0 : i32
    %c0_i32_0 = arith.constant 0 : i32
    %c0_i32_1 = arith.constant 0 : i32
    return %c0_i32, %c0_i32_0 : i32, i32
  }
  func.func @transform_3(%arg0: i32) -> (i32, i32) {
    %c0_i32 = arith.constant 0 : i32
    %c0_i32_0 = arith.constant 0 : i32
    return %c0_i32, %arg0 : i32, i32
  }
}

</mosaic_0001>

<llo_original>
// kernel: tpu_custom_call.1
$region0: #{tpu_custom_call.1}
  #allocation0 [shape = 'u32[]', space=smem, size = 0x4, offset = 0x4, fixed_abs, tag = 'smem constant byte address 0x4 - core index']
  #allocation1 [shape = 'u32[144,128]{1,0:T(1,128)}', space=vmem, size = 0x12000, scoped, tag = 'internal scratch']
  %s0 = inlined_call_operand.vmem [shape: bf16[16,16], index: 0, kind: input, shape index: {}]
  %s1 = inlined_call_operand.vmem [shape: bf16[16,128], index: 1, kind: input, shape index: {}]
  %s2 = inlined_call_operand.vmem [shape: f32[16,1], index: 2, kind: input, shape index: {}]
  %s3 = inlined_call_operand.hbm [shape: bf16[16,128], index: 3, kind: output, shape index: {}]
  %s4 = sld [smem:[#allocation0]]
  $region22: #{tpu_custom_call.1} parent=0
    _
  %s6 = ssub.s32 1, %s4
  %s7 = scalar_select 0, %s6, %s4
  $region1: #{tpu_custom_call.1} parent=0
    #allocation2 [shape = 'u8[4096]{0}', space=vmem, size = 0x1000, scoped, tag = 'output window, operand 0, single buffered']
    #allocation3 [shape = 's32[1]{0}', space=sflag, size = 0x4, scoped, tag = 'scoped memory for tpu_custom_call.1']
    %8 = vsyncpa [#allocation3], 0
    // Predicated region
    $region2: #{tpu_custom_call.1} parent=1 // pred_check
      _
    $region3: #{tpu_custom_call.1} parent=1 // pred_check_branch
      %10 = sbr.rel (0) target = $region5
    $region4: #{tpu_custom_call.1} parent=1 // pred_region
      _
    $region5: #{tpu_custom_call.1} parent=1 // pred_fallthru
      _
    // Predicated region
    $region6: #{tpu_custom_call.1} parent=1 // pred_check
      _
    $region7: #{tpu_custom_call.1} parent=1 // pred_check_branch
      %12 = sbr.rel (0) target = $region9
    $region8: #{tpu_custom_call.1} parent=1 // pred_region
      _
    $region9: #{tpu_custom_call.1} parent=1 // pred_fallthru
      _
    // Predicated region
    $region10: #{tpu_custom_call.1} parent=1 // pred_check
      _
    $region11: #{tpu_custom_call.1} parent=1 // pred_check_branch
      %14 = sbr.rel (0) target = $region13
    $region12: #{tpu_custom_call.1} parent=1 // pred_region
      _
    $region13: #{tpu_custom_call.1} parent=1 // pred_fallthru
      _
    %v16 = vld [vmem:[%s0] sm:$0xf]
    %v17 = vld [vmem:[%s0 + $0x4] sm:$0xf]
    %v18 = vld [vmem:[%s1] sm:$0xf]
    %v19 = vld [vmem:[%s1 + $0x4] sm:$0xf]
    %v20 = vld [vmem:[%s2] sm:$0xff]
    %v21 = vld [vmem:[%s2 + $0x8] sm:$0xff]
    %23 = vset.pattern.permute.xlu0 0
    %24 = vperm.xlu0 %23, %v20
    %v25 = vpop.permute.xlu0 %24
    %28 = vset.pattern.permute.xlu0 0
    %29 = vperm.xlu0 %28, %v21
    %v30 = vpop.permute.xlu0 %29
    %v34 = vunpack.c.l.b16 %v16
    %v35 = vunpack.c.l.b16 %v17
    %v36 = vpack.c.b16 %v35, %v34
    %v39 = vunpack.c.l.b16 %v18
    %v40 = vunpack.c.l.b16 %v19
    %v41 = vpack.c.b16 %v40, %v39
    %vm43 = vcmask 130048
    %v45 = vsel %vm43, %v36, 0
    %47 = vmatprep.subr.bf16.mxu0 0
    %48 = vmatpush1.bf16.msra.mxu0 %v41
    %49 = vmatprep.subr.bf16.mxu0 0
    %50 = vmatpush1.bf16.msra.mxu0 0
    %51 = vmatprep.subr.bf16.mxu0 0
    %52 = vmatpush1.bf16.msra.mxu0 0
    %53 = vmatprep.subr.bf16.mxu0 0
    %54 = vmatpush1.bf16.msra.mxu0 0
    %55 = vmatprep.subr.bf16.mxu0 0
    %56 = vmatpush1.bf16.msra.mxu0 0
    %57 = vmatprep.subr.bf16.mxu0 0
    %58 = vmatpush1.bf16.msra.mxu0 0
    %59 = vmatprep.subr.bf16.mxu0 0
    %60 = vmatpush1.bf16.msra.mxu0 0
    %61 = vmatprep.subr.bf16.mxu0 0
    %62 = vmatpush1.bf16.msra.mxu0 0
    %63 = vmatprep.subr.bf16.mxu0 0
    %64 = vmatpush1.bf16.msra.mxu0 0
    %65 = vmatprep.subr.bf16.mxu0 0
    %66 = vmatpush1.bf16.msra.mxu0 0
    %67 = vmatprep.subr.bf16.mxu0 0
    %68 = vmatpush1.bf16.msra.mxu0 0
    %69 = vmatprep.subr.bf16.mxu0 0
    %70 = vmatpush1.bf16.msra.mxu0 0
    %71 = vmatprep.subr.bf16.mxu0 0
    %72 = vmatpush1.bf16.msra.mxu0 0
    %73 = vmatprep.subr.bf16.mxu0 0
    %74 = vmatpush1.bf16.msra.mxu0 0
    %75 = vmatprep.subr.bf16.mxu0 0
    %76 = vmatpush1.bf16.msra.mxu0 0
    %77 = vmatprep.subr.bf16.mxu0 0
    %78 = vmatpush1.bf16.msra.mxu0 0
    %79 = vmatprep.mubr.bf16.mxu0 0
    %80 = vmatmul.mubr.bf16.gmra.mrb[0].mxu0 %v45
    %v81 = vpop.f32.mrb[0].mxu0
    %v82 = vadd.f32 %v25, %v81
    %v83 = vpop.f32.mrb[0].mxu0
    %v84 = vpop.f32.mrb[0].mxu0
    %v85 = vadd.f32 %v30, %v84
    %v86 = vpop.f32.mrb[0].mxu0
    %87 = vdwg.mxu0
    %v88 = vxor.u32 %v82, 2147483648
    %v89 = vxor.u32 %v85, 2147483648
    %v90 = vmul.f32 %v88, 1.442695
    %v91 = vpow.pop %v90
    %v92 = vmul.f32 %v89, 1.442695
    %v93 = vpow.pop %v92
    %v94 = vadd.f32 %v91, 1.0
    %v95 = vadd.f32 %v93, 1.0
    %v96 = vrcp.pop %v94
    %v97 = vmul.f32 1.0, %v96
    %v98 = vrcp.pop %v95
    %v99 = vmul.f32 1.0, %v98
    %v100 = vmul.f32 %v82, %v97
    %v101 = vmul.f32 %v85, %v99
    %v102 = vpack.c.bf16 %v101, %v100
    %v104 = vunpack.c.l.b16 %v102
    %v105 = vunpack.c.h.b16 %v102
    %v106 = vpack.c.b16 %v104, %v104
    %v107 = vpack.c.b16 %v105, %v105
    %110 = vst [vmem:[#allocation2] sm:$0xf] %v106
    %111 = vst [vmem:[#allocation2 + $0x4] sm:$0xf] %v107
    // Predicated region
    $region14: #{tpu_custom_call.1} parent=1 // pred_check
      _
    $region15: #{tpu_custom_call.1} parent=1 // pred_check_branch
      %113 = sbr.rel (0) target = $region17
    $region16: #{tpu_custom_call.1} parent=1 // pred_region
      %s115 = ssub.s32 128, 128
      %116 = vsyncadd [#allocation3], %s115
      %s117 = sshll.u32 [#allocation2], 4
      %s118 = int_to_ptr.vmem [resolvable:$true] %s117
      %123 = dma.vmem_to_hbm [thread:$0]  %s118, 128, %s3, [#allocation3], 64, 64, 4
    $region17: #{tpu_custom_call.1} parent=1 // pred_fallthru
      _
    // Predicated region
    $region18: #{tpu_custom_call.1} parent=1 // pred_check
      _
    $region19: #{tpu_custom_call.1} parent=1 // pred_check_branch
      %125 = sbr.rel (0) target = $region21
    $region20: #{tpu_custom_call.1} parent=1 // pred_region
      %126 = dma.done [#allocation3], 128
    $region21: #{tpu_custom_call.1} parent=1 // pred_fallthru
      _
    %127 = vsyncpa [#allocation3], 1

</llo_original>
